<compile_context>
chip_gen: v7x
topology: tpu7x:2x2x1
jax: 0.10.0
libtpu: 0.0.40
codegen_flags: <defaults>
</compile_context>

<pallas_src>
import functools

import jax
import jax.numpy as jnp
from jax import lax
from jax.experimental import pallas as pl
from jax.experimental.pallas import tpu as pltpu

_NEG_LOG_EPS = 20.723265836946414  # -log(1e-9): value at which the reference saturates


def _round_up(x, m):
    return (x + m - 1) // m * m


def _sublane_pack(dtype):
    # sublane packing: 8 rows for 32-bit, 16 for 16-bit, 32 for 8-bit dtypes
    return 8 * max(1, 4 // jnp.dtype(dtype).itemsize)


def _multi_loss_kernel(x_ref, t_ref, o_ref, acc_ref, *,
                       tile_s, tiles_per_core, valid_s):
    # x_ref: (N, C, tile_s) logits tile; t_ref: (N, 1, tile_s) narrow-int targets;
    # o_ref: (1, 1, 1) per-core partial sum; acc_ref: (N, C, 128) f32 accumulator.
    p = pl.program_id(0)   # core-split axis ("parallel")
    i = pl.program_id(1)   # spatial reduction axis ("arbitrary")

    @pl.when(i == 0)
    def _():
        acc_ref[...] = jnp.zeros_like(acc_ref)

    x = x_ref[...].astype(jnp.float32)        # (N, C, tile_s)
    t = t_ref[...].astype(jnp.int32)          # (N, 1, tile_s)

    # In-kernel one-hot along the class (sublane) axis.
    c_ids = lax.broadcasted_iota(jnp.int32, x.shape, 1)
    hit = c_ids == t                          # broadcast over classes

    # softplus(x) = -log(1-sigmoid(x)); softplus(x) - x = -log(sigmoid(x)).
    # One exp + one log (EUP) per element; single where/min instead of building a
    # float one-hot mask.  Clamp approximates the reference's eps saturation.
    sp = jnp.maximum(x, 0.0) + jnp.log(1.0 + jnp.exp(-jnp.abs(x)))
    loss = jnp.minimum(jnp.where(hit, sp - x, sp), _NEG_LOG_EPS)

    def _accumulate(v):
        # Reduce (N, C, tile_s) -> (N, C, 128) with 128-lane-aligned VPU adds
        # (static slices of vregs, no relayout), then one small accumulator add.
        r = v[:, :, 0:128]
        for b in range(1, tile_s // 128):
            r = r + v[:, :, b * 128:(b + 1) * 128]
        acc_ref[...] += r

    if valid_s is None:
        _accumulate(loss)
    else:
        start = (p * tiles_per_core + i) * tile_s
        needs_mask = start + tile_s > valid_s

        @pl.when(needs_mask)
        def _():
            lane = lax.broadcasted_iota(jnp.int32, x.shape, 2) + start
            _accumulate(jnp.where(lane < valid_s, loss, 0.0))

        @pl.when(jnp.logical_not(needs_mask))
        def _():
            _accumulate(loss)

    @pl.when(i == pl.num_programs(1) - 1)
    def _():
        # Single XLU full reduction per core-partial, once at the very end.
        o_ref[...] = jnp.sum(acc_ref[...]).reshape(1, 1, 1)


def multi_loss(input_d, target_d, *, target_tile_bytes=8 * 1024 * 1024):
    """input_d: (N, C, H, W) float logits; target_d: (N, H, W) int class indices."""
    N, C, H, W = input_d.shape
    S = H * W

    # Native layout, no transpose (reshape is free for contiguous NCHW).
    x3 = input_d.reshape(N, C, S)
    if C <= 127:
        t_dtype = jnp.int8
    elif C <= 32767:
        t_dtype = jnp.int16
    else:
        t_dtype = jnp.int32
    t3 = target_d.reshape(N, 1, S).astype(t_dtype)

    x_item = jnp.dtype(x3.dtype).itemsize
    t_item = jnp.dtype(t_dtype).itemsize

    # Per-generation VMEM budget (v7x: 64 MiB physical -> ~40 MiB scoped here;
    # v5e/v6e: 128 MiB physical -> 64 MiB scoped here).
    try:
        vmem_cap = int(getattr(pltpu.get_tpu_info(), "vmem_capacity_bytes",
                               64 * 1024 * 1024))
    except Exception:
        vmem_cap = 64 * 1024 * 1024
    vmem_limit = min((vmem_cap * 5) // 8, 64 * 1024 * 1024)

    # Accurate footprint math: sublane padding (C < 8 and narrow targets), the
    # target tile, double-buffering (x2) and the accumulator are all included.
    hbm_per_col = N * C * x_item + N * t_item                     # real HBM bytes / lane
    vmem_per_col = 2 * N * (_round_up(C, _sublane_pack(x3.dtype)) * x_item
                            + _sublane_pack(t_dtype) * t_item)    # double-buffered VMEM / lane
    acc_bytes = N * _round_up(C, 8) * 128 * 4
    slack = 2 * 1024 * 1024

    tile_s_hbm = max(128, target_tile_bytes // hbm_per_col)       # ~8 MiB of HBM / step
    tile_s_vmem = max(128, (vmem_limit - acc_bytes - slack) // vmem_per_col)
    tile_s = max(128, min(tile_s_hbm, tile_s_vmem, 32768) // 128 * 128)
    tile_s = min(tile_s, _round_up(S, 128))
    # TODO(synk): for very large N*C (where even a 128-lane tile overflows VMEM),
    # add a row-block grid axis over (N, C) instead of tiling lanes only.

    n_tiles = pl.cdiv(S, tile_s)
    # Core-split axis: halves the spatial range per TensorCore on v7x (2 TCs);
    # harmless sequential loop on v5e/v6e (1 TC).
    n_split = 2 if n_tiles >= 2 else 1
    tiles_per_core = _round_up(n_tiles, n_split) // n_split
    covered = n_split * tiles_per_core * tile_s
    valid_s = S if covered != S else None
    last_block = n_tiles - 1

    if n_split * tiles_per_core == n_tiles:
        def _in_index(p, i):
            return (0, 0, p * tiles_per_core + i)
    else:
        def _in_index(p, i):
            # Over-run tiles (ragged core split) re-read an in-bounds block; their
            # contribution is masked to zero in the kernel.
            return (0, 0, jnp.minimum(p * tiles_per_core + i, last_block))

    kernel = functools.partial(_multi_loss_kernel, tile_s=tile_s,
                               tiles_per_core=tiles_per_core, valid_s=valid_s)

    partials = pl.pallas_call(
        kernel,
        out_shape=jax.ShapeDtypeStruct((n_split, 1, 1), jnp.float32),
        grid_spec=pltpu.PrefetchScalarGridSpec(
            num_scalar_prefetch=0,
            grid=(n_split, tiles_per_core),
            in_specs=[
                # TODO(synk): if v7x profiles show exposed DMA at step boundaries,
                # add pipeline_mode=pl.Buffered(3) on this logits BlockSpec.
                pl.BlockSpec((N, C, tile_s), _in_index),
                pl.BlockSpec((N, 1, tile_s), _in_index),
            ],
            out_specs=pl.BlockSpec((1, 1, 1), lambda p, i: (p, 0, 0)),
            scratch_shapes=[pltpu.VMEM((N, C, 128), jnp.float32)],
        ),
        compiler_params=pltpu.CompilerParams(
            dimension_semantics=("parallel", "arbitrary"),
            vmem_limit_bytes=int(vmem_limit),
        ),
    )(x3, t3)
    return jnp.sum(partials)


def multi_loss_reference(input_d, target_d):
    """Pure-JAX reference matching the PyTorch module."""
    C = input_d.shape[1]
    p = jax.nn.sigmoid(input_d)
    target_v = jnp.transpose(
        jax.nn.one_hot(target_d, C, dtype=p.dtype), (0, 3, 1, 2)
    )
    log_p = jnp.log(p + 1e-9)
    log_np = jnp.log(1.0 - p + 1e-9)
    loss = -(target_v * log_p + (1.0 - target_v) * log_np)
    return jnp.sum(loss)


if __name__ == "__main__":
    key = jax.random.PRNGKey(0)
    k1, k2 = jax.random.split(key)

    N, C, H, W = 2, 4, 16, 16
    input_d = jax.random.normal(k1, (N, C, H, W), dtype=jnp.float32)
    target_d = jax.random.randint(k2, (N, H, W), 0, C, dtype=jnp.int32)

    out = jax.jit(multi_loss)(input_d, target_d)
    out = jax.block_until_ready(out)

    ref = multi_loss_reference(input_d, target_d)
    assert jnp.allclose(out, ref, rtol=1e-4, atol=1e-2), (out, ref)

    print("KERNEL_OK")
</pallas_src>

<mosaic_0001>
module attributes {stable_mosaic.version = 11 : i64} {
  func.func @_multi_loss_kernel(%arg0: i32, %arg1: i32, %arg2: memref<2x4x256xf32, #tpu.memory_space<vmem>>, %arg3: memref<2x1x256xi8, #tpu.memory_space<vmem>>, %arg4: memref<1x1x1xf32, #tpu.memory_space<vmem>>, %arg5: memref<2x4x128xf32, #tpu.memory_space<vmem>>) attributes {dimension_semantics = [#tpu.dimension_semantics<parallel>, #tpu.dimension_semantics<arbitrary>], iteration_bounds = array<i64: 1, 1>, scalar_prefetch = 0 : i64, scratch_operands = 1 : i64, tpu.core_type = #tpu.core_type<tc>, window_params = [{transform_indices = @transform_0, window_bounds = array<i64: 2, 4, 256>}, {transform_indices = @transform_1, window_bounds = array<i64: 2, 1, 256>}, {transform_indices = @transform_2, window_bounds = array<i64: 1, 1, 1>}]} {
    %c0_i32 = arith.constant 0 : i32
    %0 = arith.cmpi eq, %arg1, %c0_i32 : i32
    %1 = arith.extui %0 : i1 to i32
    %c0_i32_0 = arith.constant 0 : i32
    %2 = arith.cmpi ne, %1, %c0_i32_0 : i32
    scf.if %2 {
      %cst_17 = arith.constant 0.000000e+00 : f32
      %32 = vector.broadcast %cst_17 : f32 to vector<2x4x128xf32>
      %c0_18 = arith.constant 0 : index
      %c0_19 = arith.constant 0 : index
      %c0_20 = arith.constant 0 : index
      %33 = vector.load %arg5[%c0_18, %c0_19, %c0_20] : memref<2x4x128xf32, #tpu.memory_space<vmem>>, vector<2x4x128xf32>
      tpu.vector_store %arg5[%c0_18, %c0_19, %c0_20], %32 {strides = array<i32>} : memref<2x4x128xf32, #tpu.memory_space<vmem>>, vector<2x4x128xf32>,
    } else {
    }
    %c0 = arith.constant 0 : index
    %c0_1 = arith.constant 0 : index
    %c0_2 = arith.constant 0 : index
    %3 = vector.load %arg2[%c0, %c0_1, %c0_2] : memref<2x4x256xf32, #tpu.memory_space<vmem>>, vector<2x4x256xf32>
    %c0_3 = arith.constant 0 : index
    %c0_4 = arith.constant 0 : index
    %c0_5 = arith.constant 0 : index
    %4 = vector.load %arg3[%c0_3, %c0_4, %c0_5] : memref<2x1x256xi8, #tpu.memory_space<vmem>>, vector<2x1x256xi8>
    %5 = arith.extsi %4 : vector<2x1x256xi8> to vector<2x1x256xi32>
    %6 = tpu.iota {dimensions = array<i32: 1>} : vector<2x4x256xi32>
    %7 = vector.broadcast %5 : vector<2x1x256xi32> to vector<2x4x256xi32>
    %8 = arith.cmpi eq, %6, %7 : vector<2x4x256xi32>
    %cst = arith.constant 0.000000e+00 : f32
    %9 = vector.broadcast %cst : f32 to vector<2x4x256xf32>
    %10 = arith.maximumf %3, %9 : vector<2x4x256xf32>
    %11 = math.absf %3 : vector<2x4x256xf32>
    %cst_6 = arith.constant 0.000000e+00 : f32
    %12 = vector.broadcast %cst_6 : f32 to vector<2x4x256xf32>
    %13 = arith.subf %12, %11 : vector<2x4x256xf32>
    %14 = math.exp %13 : vector<2x4x256xf32>
    %cst_7 = arith.constant 1.000000e+00 : f32
    %15 = vector.broadcast %cst_7 : f32 to vector<2x4x256xf32>
    %16 = arith.addf %15, %14 : vector<2x4x256xf32>
    %17 = math.log %16 : vector<2x4x256xf32>
    %18 = arith.addf %10, %17 : vector<2x4x256xf32>
    %19 = arith.subf %18, %3 : vector<2x4x256xf32>
    %20 = arith.select %8, %19, %18 : vector<2x4x256xi1>, vector<2x4x256xf32>
    %cst_8 = arith.constant 20.7232666 : f32
    %21 = vector.broadcast %cst_8 : f32 to vector<2x4x256xf32>
    %22 = arith.minimumf %20, %21 : vector<2x4x256xf32>
    %23 = vector.extract_strided_slice %22 {offsets = [0, 0, 0], sizes = [2, 4, 128], strides = [1, 1, 1]} : vector<2x4x256xf32> to vector<2x4x128xf32>
    %24 = vector.extract_strided_slice %22 {offsets = [0, 0, 128], sizes = [2, 4, 128], strides = [1, 1, 1]} : vector<2x4x256xf32> to vector<2x4x128xf32>
    %25 = arith.addf %23, %24 : vector<2x4x128xf32>
    %c0_9 = arith.constant 0 : index
    %c0_10 = arith.constant 0 : index
    %c0_11 = arith.constant 0 : index
    %26 = vector.load %arg5[%c0_9, %c0_10, %c0_11] : memref<2x4x128xf32, #tpu.memory_space<vmem>>, vector<2x4x128xf32>
    %27 = arith.addf %26, %25 : vector<2x4x128xf32>
    %c0_12 = arith.constant 0 : index
    %c0_13 = arith.constant 0 : index
    %c0_14 = arith.constant 0 : index
    %28 = vector.load %arg5[%c0_12, %c0_13, %c0_14] : memref<2x4x128xf32, #tpu.memory_space<vmem>>, vector<2x4x128xf32>
    tpu.vector_store %arg5[%c0_12, %c0_13, %c0_14], %27 {strides = array<i32>} : memref<2x4x128xf32, #tpu.memory_space<vmem>>, vector<2x4x128xf32>,
    %c0_i32_15 = arith.constant 0 : i32
    %29 = arith.cmpi eq, %arg1, %c0_i32_15 : i32
    %30 = arith.extui %29 : i1 to i32
    %c0_i32_16 = arith.constant 0 : i32
    %31 = arith.cmpi ne, %30, %c0_i32_16 : i32
    scf.if %31 {
      %c0_17 = arith.constant 0 : index
      %c0_18 = arith.constant 0 : index
      %c0_19 = arith.constant 0 : index
      %32 = vector.load %arg5[%c0_17, %c0_18, %c0_19] : memref<2x4x128xf32, #tpu.memory_space<vmem>>, vector<2x4x128xf32>
      %33 = vector.shape_cast %32 : vector<2x4x128xf32> to vector<1x2x4x128xf32>
      %cst_20 = arith.constant dense<0.000000e+00> : vector<1xf32>
      %34 = vector.multi_reduction <add>, %33, %cst_20 [1, 2, 3] : vector<1x2x4x128xf32> to vector<1xf32>
      %35 = vector.shape_cast %34 : vector<1xf32> to vector<1x1x1x1xf32>
      %36 = vector.extract %35[0, 0, 0, 0] : f32 from vector<1x1x1x1xf32>
      %37 = vector.broadcast %36 : f32 to vector<1x1x1xf32>
      %c0_21 = arith.constant 0 : index
      %c0_22 = arith.constant 0 : index
      %c0_23 = arith.constant 0 : index
      %38 = vector.load %arg4[%c0_21, %c0_22, %c0_23] : memref<1x1x1xf32, #tpu.memory_space<vmem>>, vector<1x1x1xf32>
      tpu.vector_store %arg4[%c0_21, %c0_22, %c0_23], %37 {strides = array<i32>} : memref<1x1x1xf32, #tpu.memory_space<vmem>>, vector<1x1x1xf32>,
    } else {
    }
    return
  }
  func.func @transform_0(%arg0: i32, %arg1: i32) -> (i32, i32, i32) {
    %c1_i32 = arith.constant 1 : i32
    %0 = arith.muli %arg0, %c1_i32 : i32
    %1 = arith.addi %0, %arg1 : i32
    %c0_i32 = arith.constant 0 : i32
    %c0_i32_0 = arith.constant 0 : i32
    %c0_i32_1 = arith.constant 0 : i32
    return %c0_i32, %c0_i32_0, %1 : i32, i32, i32
  }
  func.func @transform_1(%arg0: i32, %arg1: i32) -> (i32, i32, i32) {
    %c1_i32 = arith.constant 1 : i32
    %0 = arith.muli %arg0, %c1_i32 : i32
    %1 = arith.addi %0, %arg1 : i32
    %c0_i32 = arith.constant 0 : i32
    %c0_i32_0 = arith.constant 0 : i32
    %c0_i32_1 = arith.constant 0 : i32
    return %c0_i32, %c0_i32_0, %1 : i32, i32, i32
  }
  func.func @transform_2(%arg0: i32, %arg1: i32) -> (i32, i32, i32) {
    %c0_i32 = arith.constant 0 : i32
    %c0_i32_0 = arith.constant 0 : i32
    %c0_i32_1 = arith.constant 0 : i32
    return %arg0, %c0_i32, %c0_i32_0 : i32, i32, i32
  }
}

</mosaic_0001>

<llo_original>
// kernel: multi_loss.1
$region0: #{multi_loss.1}
  #allocation0 [shape = 'u32[]', space=smem, size = 0x4, offset = 0x4, fixed_abs, tag = 'smem constant byte address 0x4 - core index']
  #allocation1 [shape = 'u32[144,128]{1,0:T(1,128)}', space=vmem, size = 0x12000, scoped, tag = 'internal scratch']
  #allocation2 [shape = 'f32[2,4,128]{2,1,0:T(4,128)}', space=vmem, size = 0x1000, scoped, tag = 'scratch operand']
  %s0 = inlined_call_operand.vmem [shape: f32[2,4,256], index: 0, kind: input, shape index: {}]
  %s1 = inlined_call_operand.vmem [shape: s8[2,1,256], index: 1, kind: input, shape index: {}]
  %s2 = inlined_call_operand.hbm [shape: f32[1,1,1], index: 2, kind: output, shape index: {}]
  %s3 = sld [smem:[#allocation0]]
  $region26: #{multi_loss.1} parent=0
    _
  %s5 = ssub.s32 1, %s3
  %s6 = scalar_select 0, %s5, %s3
  $region1: #{multi_loss.1} parent=0
    #allocation3 [shape = 'u8[512]{0}', space=vmem, size = 0x400, scoped, tag = 'output window, operand 0, single buffered']
    #allocation4 [shape = 's32[1]{0}', space=sflag, size = 0x4, scoped, tag = 'scoped memory for multi_loss.1']
    %7 = vsyncpa [#allocation4], 0
    // Predicated region
    $region2: #{multi_loss.1} parent=1 // pred_check
      _
    $region3: #{multi_loss.1} parent=1 // pred_check_branch
      %9 = sbr.rel (0) target = $region5
    $region4: #{multi_loss.1} parent=1 // pred_region
      %s10 = sadd.s32 0, 0
      %s11 = smul.u32 2, %s10
      %p12 = scmp.lt.s32.totalorder %s11, 1
      %s13 = scalar_select %p12, %s11, 1
      %s14 = smul.addr %s13, 4
      %s15 = scalar_lea.vmem %s0, %s14
      %s16 = sadd.s32 0, 0
      %s17 = smul.u32 2, %s16
    $region5: #{multi_loss.1} parent=1 // pred_fallthru
      _
    // Predicated region
    $region6: #{multi_loss.1} parent=1 // pred_check
      _
    $region7: #{multi_loss.1} parent=1 // pred_check_branch
      %19 = sbr.rel (0) target = $region9
    $region8: #{multi_loss.1} parent=1 // pred_region
      %s20 = sadd.s32 0, 0
      %s21 = smul.u32 2, %s20
      %p22 = scmp.lt.s32.totalorder %s21, 1
      %s23 = scalar_select %p22, %s21, 1
      %s24 = scalar_lea.vmem %s1, %s23
      %s25 = sadd.s32 0, 0
      %s26 = smul.u32 2, %s25
    $region9: #{multi_loss.1} parent=1 // pred_fallthru
      _
    %s27 = sadd.s32 0, 0
    %s28 = smul.u32 2, %s27
    %p29 = scmp.lt.s32.totalorder %s28, 1
    %s30 = scalar_select %p29, %s28, 1
    %s31 = smul.addr %s30, 4
    %s32 = scalar_lea.vmem %s0, %s31
    %s33 = sadd.s32 0, 0
    %s34 = smul.u32 2, %s33
    %p35 = scmp.lt.s32.totalorder %s34, 1
    %s36 = scalar_select %p35, %s34, 1
    %s37 = scalar_lea.vmem %s1, %s36
    %s38 = sadd.s32 0, 0
    %s39 = smul.u32 2, %s38
    %p40 = scmp.lt.s32.totalorder %s39, 1
    %s41 = scalar_select %p40, %s39, 1
    %s42 = smul.addr %s41, 4
    %s43 = scalar_lea.vmem %s0, %s42
    %s44 = sadd.s32 0, 0
    %s45 = smul.u32 2, %s44
    %s46 = sadd.s32 0, 0
    %s47 = smul.u32 2, %s46
    %p48 = scmp.lt.s32.totalorder %s47, 1
    %s49 = scalar_select %p48, %s47, 1
    %s50 = scalar_lea.vmem %s1, %s49
    %s51 = sadd.s32 0, 0
    %s52 = smul.u32 2, %s51
    %p53 = scmp.eq.s32.totalorder 0, 0
    // Predicated region
    $region10: #{multi_loss.1} parent=1 // pred_check
      %p54 = pneg %p53
    $region11: #{multi_loss.1} parent=1 // pred_check_branch
      %56 = sbr.rel (%p54) target = $region13
    $region12: #{multi_loss.1} parent=1 // pred_region
      %57 = vst [vmem:[#allocation2] sm:$0xf] 0.0
      %58 = vst [vmem:[#allocation2 + $0x4] sm:$0xf] 0.0
    $region13: #{multi_loss.1} parent=1 // pred_fallthru
      _
    %v59 = vld [vmem:[%s43] sm:$0xff]
    %v60 = vld [vmem:[%s43 + $0x8] sm:$0xff]
    %v61 = vld [vmem:[%s50] sm:$0x3]
    %v62 = vld [vmem:[%s50 + $0x2] sm:$0x3]
    %v63 = vunpack.c.0.s8 %v61
    %v64 = vunpack.c.0.s8 %v62
    %v65 = vlaneseq
    %v66 = vshrl.u32 %v65, 7
    %v67 = vlaneseq
    %v68 = vshrl.u32 %v67, 7
    %v69 = vsub.s32 0, %v68
    %v70 = vrot.slane %v63, %v69
    %v71 = vlaneseq
    %v72 = vshrl.u32 %v71, 7
    %v73 = vsub.s32 4, %v72
    %v74 = vrot.slane %v63, %v73
    %v75 = vlaneseq
    %v76 = vshrl.u32 %v75, 7
    %v77 = vsub.s32 0, %v76
    %v78 = vrot.slane %v64, %v77
    %v79 = vlaneseq
    %v80 = vshrl.u32 %v79, 7
    %v81 = vsub.s32 4, %v80
    %v82 = vrot.slane %v64, %v81
    %v83 = vlaneseq
    %v84 = vshrl.u32 %v83, 7
    %v85 = vsub.s32 0, %v84
    %v86 = vrot.slane %v70, %v85
    %v87 = vlaneseq
    %v88 = vshrl.u32 %v87, 7
    %v89 = vsub.s32 0, %v88
    %v90 = vrot.slane %v74, %v89
    %v91 = vlaneseq
    %v92 = vshrl.u32 %v91, 7
    %v93 = vsub.s32 0, %v92
    %v94 = vrot.slane %v78, %v93
    %v95 = vlaneseq
    %v96 = vshrl.u32 %v95, 7
    %v97 = vsub.s32 0, %v96
    %v98 = vrot.slane %v82, %v97
    %vm99 = vcmp.eq.s32.totalorder %v66, %v86
    %vm100 = vcmp.eq.s32.totalorder %v66, %v90
    %vm101 = vcmp.eq.s32.totalorder %v66, %v94
    %vm102 = vcmp.eq.s32.totalorder %v66, %v98
    %v103 = vmax.f32 %v59, 0.0
    %v104 = vmax.f32 %v60, 0.0
    %v105 = vand.u32 2147483647, %v59
    %v106 = vand.u32 2147483647, %v60
    %v107 = vsub.f32 0.0, %v105
    %v108 = vsub.f32 0.0, %v106
    %v109 = vmul.f32 %v107, 1.442695
    %v110 = vpow.pop %v109
    %v111 = vmul.f32 %v108, 1.442695
    %v112 = vpow.pop %v111
    %v113 = vadd.f32 %v110, 1.0
    %v114 = vadd.f32 %v112, 1.0
    %v115 = vlog2.pop %v113
    %v116 = vmul.f32 %v115, 0.6931472
    %v117 = vlog2.pop %v114
    %v118 = vmul.f32 %v117, 0.6931472
    %v119 = vadd.f32 %v103, %v116
    %v120 = vadd.f32 %v104, %v118
    %v121 = vsub.f32 %v119, %v59
    %v122 = vsub.f32 %v120, %v60
    %v125 = vcombine.high %v121, %v121
    %v126 = vcombine.high %v122, %v122
    %v131 = vcombine.high %v119, %v119
    %v132 = vcombine.high %v120, %v120
    %v135 = vsel %vm99, %v121, %v119
    %v136 = vsel %vm100, %v125, %v131
    %v137 = vsel %vm101, %v122, %v120
    %v138 = vsel %vm102, %v126, %v132
    %v139 = vmin.f32 %v135, 20.723267
    %v140 = vmin.f32 %v136, 20.723267
    %v141 = vmin.f32 %v137, 20.723267
    %v142 = vmin.f32 %v138, 20.723267
    %v143 = vadd.f32 %v139, %v140
    %v144 = vadd.f32 %v141, %v142
    %v145 = vld [vmem:[#allocation2] sm:$0xf]
    %v146 = vld [vmem:[#allocation2 + $0x4] sm:$0xf]
    %v147 = vadd.f32 %v145, %v143
    %v148 = vadd.f32 %v146, %v144
    %149 = vst [vmem:[#allocation2] sm:$0xf] %v147
    %150 = vst [vmem:[#allocation2 + $0x4] sm:$0xf] %v148
    // Predicated region
    $region14: #{multi_loss.1} parent=1 // pred_check
      %p151 = pneg %p53
    $region15: #{multi_loss.1} parent=1 // pred_check_branch
      %153 = sbr.rel (%p151) target = $region17
    $region16: #{multi_loss.1} parent=1 // pred_region
      %v154 = vld [vmem:[#allocation2] sm:$0xf]
      %v155 = vld [vmem:[#allocation2 + $0x4] sm:$0xf]
      %vm156 = vcmask 1043456
      %v157 = vsel %vm156, %v154, 0.0
      %v158 = vsel %vm156, %v155, 0.0
      %v159 = vadd.f32 %v157, %v158
      %160 = vadd.xlane.f32.xlu0 %v159
      %v161 = vpop.xlane.xlu0 %160
      %v162 = vrot.slane %v161, 4
      %v163 = vadd.f32 %v161, %v162
      %v164 = vrot.slane %v163, 2
      %v165 = vadd.f32 %v163, %v164
      %v166 = vrot.slane %v165, 1
      %v167 = vadd.f32 %v165, %v166
      %s168 = vtos %v167
      %v169 = vstv %s168
      %vm170 = vcmask 0
      %171 = vst.msk [vmem:[#allocation3] sm:$0x1] %vm170, %v169
    $region17: #{multi_loss.1} parent=1 // pred_fallthru
      _
    // Predicated region
    $region18: #{multi_loss.1} parent=1 // pred_check
      _
    $region19: #{multi_loss.1} parent=1 // pred_check_branch
      %173 = sbr.rel (0) target = $region21
    $region20: #{multi_loss.1} parent=1 // pred_region
      %s175 = ssub.s32 16, 16
      %176 = vsyncadd [#allocation4], %s175
      %s178 = sshll.u32 [#allocation3], 4
      %s179 = int_to_ptr.vmem [resolvable:$true] %s178
      %181 = dma.vmem_to_hbm [thread:$0]  %s179, 16, %s2, [#allocation4]
    $region21: #{multi_loss.1} parent=1 // pred_fallthru
      _
    // Predicated region
    $region22: #{multi_loss.1} parent=1 // pred_check
      _
    $region23: #{multi_loss.1} parent=1 // pred_check_branch
      %183 = sbr.rel (0) target = $region25
    $region24: #{multi_loss.1} parent=1 // pred_region
      %184 = dma.done [#allocation4], 16
    $region25: #{multi_loss.1} parent=1 // pred_fallthru
      _
    %185 = vsyncpa [#allocation4], 1

</llo_original>
